<compile_context>
chip_gen: v7x
topology: tpu7x:2x2x1
jax: 0.10.0
libtpu: 0.0.40
codegen_flags: <defaults>
</compile_context>

<pallas_src>
import functools

import jax
import jax.numpy as jnp
from jax.experimental import pallas as pl
from jax.experimental.pallas import tpu as pltpu


VALUE_LANES = 128                 # lane-dense width for the value-head output block
LM_TN_MAX = 512                   # max vocab tile (multiple of 256 for v6e MXU)
LM_TM_CANDIDATES = (1024, 768, 512, 384, 256, 128)
_DEFAULT_VMEM_BYTES = 64 * 1024 * 1024   # conservative fallback (v7x per-TC VMEM)


def _round_up(x, m):
    return (x + m - 1) // m * m


def _vmem_capacity_bytes():
    try:
        return int(pltpu.get_tpu_info().vmem_capacity_bytes)
    except Exception:  # interpret mode / older runtimes: assume the tightest chip
        return _DEFAULT_VMEM_BYTES


def _resident_spec(block_shape, index_map):
    """BlockSpec for a grid-invariant operand: request single buffering so the
    weights are not pointlessly double-buffered in VMEM."""
    buffered = getattr(pl, "Buffered", None)
    if buffered is not None:
        try:
            return pl.BlockSpec(block_shape, index_map, pipeline_mode=buffered(1))
        except TypeError:
            pass
    return pl.BlockSpec(block_shape, index_map)


# ----------------------------- Pallas kernels ------------------------------

def lm_head_kernel(h_ref, w_ref, o_ref):
    # h_ref: (tm, H) bf16, w_ref: (H, tn) bf16, o_ref: (tm, tn) f32
    o_ref[...] = jnp.dot(h_ref[...], w_ref[...], preferred_element_type=jnp.float32)


def value_head_kernel(h_ref, w1_ref, b1_ref, w2_ref, b2_ref, w3_ref, b3_ref, o_ref):
    # h_ref: (tm, H) bf16; w1/w2: (H, H) bf16; b1/b2: (1, H) f32
    # w3_ref: (H, 128) bf16 (col 0 = real Linear(H,1) weight, rest zero)
    # b3_ref: (1, 128) f32 broadcast of the scalar bias; o_ref: (tm, 128) f32
    x1 = jnp.dot(h_ref[...], w1_ref[...], preferred_element_type=jnp.float32) + b1_ref[...]
    x1 = jnp.maximum(x1, 0.0)                     # Dropout == identity (eval mode)
    x2 = jnp.dot(x1.astype(jnp.bfloat16), w2_ref[...],
                 preferred_element_type=jnp.float32) + b2_ref[...]
    x2 = jnp.maximum(x2, 0.0)
    # Final Linear(H, 1) on the MXU with a lane-dense (tm, 128) result.
    o_ref[...] = jnp.dot(x2.astype(jnp.bfloat16), w3_ref[...],
                         preferred_element_type=jnp.float32) + b3_ref[...]


# ----------------------------- wrappers ------------------------------------

def _lm_head_tiles(N, H, v_pad, vmem_bytes):
    """Generation-aware tile choice: biggest row tile whose double-buffered working
    set fits ~40% of physical VMEM (leaves room for compiler scratch)."""
    tn = min(LM_TN_MAX, v_pad)
    budget = int(vmem_bytes * 0.40)
    tm = LM_TM_CANDIDATES[-1]
    for cand in LM_TM_CANDIDATES:
        fp = 2 * cand * H * 2 + 2 * H * tn * 2 + 2 * cand * tn * 4
        if fp <= budget:
            tm = cand
            break
    tm = min(tm, _round_up(max(N, 1), 16))        # bf16 sublane packing: multiple of 16
    return tm, tn


def lm_head_pallas(hidden_flat, w_lm, *, vocab_size):
    """hidden_flat [N,H] bf16 @ W_lm [H, v_pad] bf16 (pre-padded) -> [N, V] f32."""
    N, H = hidden_flat.shape
    v_pad = w_lm.shape[1]
    vmem_bytes = _vmem_capacity_bytes()
    tm, tn = _lm_head_tiles(N, H, v_pad, vmem_bytes)
    assert v_pad % tn == 0
    n_pad = _round_up(N, tm)

    h = hidden_flat if n_pad == N else jnp.pad(hidden_flat, ((0, n_pad - N), (0, 0)))

    working_set = 2 * tm * H * 2 + 2 * H * tn * 2 + 2 * tm * tn * 4
    vmem_limit = min(int(vmem_bytes * 0.70),
                     max(32 * 1024 * 1024, working_set + 16 * 1024 * 1024))

    cost = pl.CostEstimate(
        flops=2 * n_pad * H * v_pad,
        transcendentals=0,
        bytes_accessed=(n_pad // tm) * H * v_pad * 2 + n_pad * H * 2 + n_pad * v_pad * 4,
    )

    out = pl.pallas_call(
        lm_head_kernel,
        out_shape=jax.ShapeDtypeStruct((n_pad, v_pad), jnp.float32),
        grid_spec=pltpu.PrefetchScalarGridSpec(
            num_scalar_prefetch=0,
            grid=(n_pad // tm, v_pad // tn),
            in_specs=[
                pl.BlockSpec((tm, H), lambda i, j: (i, 0)),   # hidden rows
                pl.BlockSpec((H, tn), lambda i, j: (0, j)),   # vocab slice of W_lm
            ],
            out_specs=pl.BlockSpec((tm, tn), lambda i, j: (i, j)),
        ),
        compiler_params=pltpu.CompilerParams(
            dimension_semantics=("parallel", "parallel"),
            vmem_limit_bytes=vmem_limit,
        ),
        cost_estimate=cost,
    )(h, w_lm)

    if n_pad != N or v_pad != vocab_size:
        # Only materialize the slice when padding actually happened.
        out = out[:N, :vocab_size]
    return out


def value_head_pallas(hidden_flat, w1, b1, w2, b2, w3, b3, *, tm=128):
    """Fused ValueHead on pre-prepared (bf16 / lane-padded) weights -> [N] f32."""
    N, H = hidden_flat.shape
    # Row tile decoupled from the lm_head tile: the value head is weight-stream
    # bound, and a small tm keeps the (tm,H) f32 intermediates x1/x2 cheap in VMEM.
    tm = min(tm, _round_up(max(N, 1), 16))
    n_pad = _round_up(N, tm)
    h = hidden_flat if n_pad == N else jnp.pad(hidden_flat, ((0, n_pad - N), (0, 0)))

    vmem_bytes = _vmem_capacity_bytes()
    resident = 2 * H * H * 2 + H * VALUE_LANES * 2 + (2 * H + VALUE_LANES) * 4
    streams = 2 * tm * H * 2 + 2 * tm * VALUE_LANES * 4 + 2 * tm * H * 4
    vmem_limit = min(int(vmem_bytes * 0.75),
                     max(32 * 1024 * 1024, resident + streams + 8 * 1024 * 1024))
    # TODO(synk): K-tile W1/W2 (inner pltpu.emit_pipeline) once `resident` exceeds
    # this budget (H >~ 2800 on v7x, H >~ 4500 on v5e/v6e).

    cost = pl.CostEstimate(
        flops=2 * n_pad * H * (2 * H + VALUE_LANES),
        transcendentals=0,
        bytes_accessed=(n_pad * H * 2 + 2 * H * H * 2 + H * VALUE_LANES * 2
                        + 2 * H * 4 + VALUE_LANES * 4 + n_pad * VALUE_LANES * 4),
    )

    out = pl.pallas_call(
        value_head_kernel,
        out_shape=jax.ShapeDtypeStruct((n_pad, VALUE_LANES), jnp.float32),
        grid_spec=pltpu.PrefetchScalarGridSpec(
            num_scalar_prefetch=0,
            grid=(n_pad // tm,),
            in_specs=[
                pl.BlockSpec((tm, H), lambda i: (i, 0)),                # hidden block
                _resident_spec((H, H), lambda i: (0, 0)),               # W1 (bf16)
                _resident_spec((1, H), lambda i: (0, 0)),               # b1 (f32)
                _resident_spec((H, H), lambda i: (0, 0)),               # W2 (bf16)
                _resident_spec((1, H), lambda i: (0, 0)),               # b2 (f32)
                _resident_spec((H, VALUE_LANES), lambda i: (0, 0)),     # W3 padded col
                _resident_spec((1, VALUE_LANES), lambda i: (0, 0)),     # b3 broadcast
            ],
            out_specs=pl.BlockSpec((tm, VALUE_LANES), lambda i: (i, 0)),
        ),
        compiler_params=pltpu.CompilerParams(
            dimension_semantics=("parallel",),
            vmem_limit_bytes=vmem_limit,
        ),
        cost_estimate=cost,
    )(h, w1, b1, w2, b2, w3, b3)
    return out[:N, 0]


# ------------------------- one-time parameter prep --------------------------

def prepare_params(raw):
    """One-time weight casts / pads -- call OUTSIDE the per-step hot path so none of
    these weight-sized XLA ops run on every forward."""
    H = raw["w1"].shape[0]
    V = raw["w_lm"].shape[1]
    v_pad = _round_up(V, LM_TN_MAX) if V >= LM_TN_MAX else _round_up(V, 128)
    w_lm = raw["w_lm"].astype(jnp.bfloat16)
    if v_pad != V:
        w_lm = jnp.pad(w_lm, ((0, 0), (0, v_pad - V)))
    # Final Linear(H,1) packed as a lane-dense (H,128) column (col 0 = real weight).
    w3_col = jnp.zeros((H, VALUE_LANES), jnp.float32).at[:, 0].set(raw["w3"].reshape(H))
    return {
        "embed": raw["embed"],
        "w_lm": w_lm,                                       # [H, v_pad] bf16
        "w1": raw["w1"].astype(jnp.bfloat16),
        "b1": raw["b1"].astype(jnp.float32),
        "w2": raw["w2"].astype(jnp.bfloat16),
        "b2": raw["b2"].astype(jnp.float32),
        "w3": w3_col.astype(jnp.bfloat16),                  # [H, 128] bf16
        "b3": jnp.broadcast_to(raw["b3"].reshape(1, 1),
                               (1, VALUE_LANES)).astype(jnp.float32),
    }


# ----------------------------- forward pass ---------------------------------

def forward_with_value_head(input_ids, params, *, vocab_size):
    """AutoModelForCausalLMWithValueHead.forward semantics:
       returns (lm_logits [B,S,V] f32, loss (None), value [B,S] f32)."""
    B, S = input_ids.shape
    # --- synthetic base causal LM trunk (glue): embedding lookup -> last_hidden_state
    hidden = params["embed"][input_ids]                     # [B, S, H] bf16
    H = hidden.shape[-1]
    hidden_flat = hidden.reshape(B * S, H)

    # --- lm_head (Pallas) -> logits, float32 per the module contract ---
    logits = lm_head_pallas(hidden_flat, params["w_lm"],
                            vocab_size=vocab_size).reshape(B, S, vocab_size)

    # --- value head (Pallas) -> value, squeeze(-1) ---
    value = value_head_pallas(hidden_flat, params["w1"], params["b1"],
                              params["w2"], params["b2"],
                              params["w3"], params["b3"]).reshape(B, S)

    loss = None   # base model received no labels
    return logits, loss, value


# ----------------------------- reference (plain JAX) ------------------------

def reference_forward(input_ids, raw_params):
    # Mirrors the kernel precision (bf16 MXU operands, f32 accumulation).
    hidden = raw_params["embed"][input_ids]
    B, S, H = hidden.shape
    h = hidden.reshape(B * S, H)
    logits = jnp.dot(h, raw_params["w_lm"], preferred_element_type=jnp.float32)
    w1b = raw_params["w1"].astype(jnp.bfloat16)
    w2b = raw_params["w2"].astype(jnp.bfloat16)
    w3b = raw_params["w3"].astype(jnp.bfloat16).reshape(H)
    x1 = jnp.maximum(jnp.dot(h, w1b, preferred_element_type=jnp.float32)
                     + raw_params["b1"], 0.0)
    x2 = jnp.maximum(jnp.dot(x1.astype(jnp.bfloat16), w2b,
                             preferred_element_type=jnp.float32)
                     + raw_params["b2"], 0.0)
    value = (jnp.dot(x2.astype(jnp.bfloat16), w3b, preferred_element_type=jnp.float32)
             + raw_params["b3"][0, 0])
    return logits.reshape(B, S, -1), value.reshape(B, S)


# ----------------------------- main -----------------------------------------

if __name__ == "__main__":
    B, S, H, V = 2, 8, 32, 256   # small shapes; N = B*S = 16 rows

    key = jax.random.PRNGKey(0)
    ks = jax.random.split(key, 8)
    raw_params = {
        # synthetic base model (bf16, as a real trunk would emit)
        "embed": (jax.random.normal(ks[0], (V, H), jnp.float32) * 0.05).astype(jnp.bfloat16),
        "w_lm":  (jax.random.normal(ks[1], (H, V), jnp.float32) * 0.05).astype(jnp.bfloat16),
        # ValueHead: Linear(H,H), Linear(H,H), Linear(H,1) -- stored FP32 per spec
        "w1": jax.random.normal(ks[2], (H, H), jnp.float32) * 0.2,
        "b1": jax.random.normal(ks[6], (1, H), jnp.float32) * 0.05,
        "w2": jax.random.normal(ks[3], (H, H), jnp.float32) * 0.2,
        "b2": jax.random.normal(ks[7], (1, H), jnp.float32) * 0.05,
        "w3": jax.random.normal(ks[4], (1, H), jnp.float32) * 0.2,
        "b3": jnp.full((1, 1), 0.03, jnp.float32),
    }

    input_ids = jax.random.randint(ks[5], (B, S), 0, V, dtype=jnp.int32)

    # One-time weight prep (casts / pads) hoisted out of the per-call path.
    params = jax.tree_util.tree_map(jnp.asarray, prepare_params(raw_params))

    fwd = jax.jit(functools.partial(forward_with_value_head, vocab_size=V))
    logits, loss, value = fwd(input_ids, params)
    jax.block_until_ready((logits, value))

    # sanity check against plain-JAX reference
    ref_logits, ref_value = reference_forward(input_ids, raw_params)
    assert logits.shape == (B, S, V) and logits.dtype == jnp.float32
    assert value.shape == (B, S) and value.dtype == jnp.float32
    assert loss is None
    assert jnp.allclose(logits, ref_logits, atol=1e-3, rtol=1e-3)
    assert jnp.allclose(value, ref_value, atol=1e-3, rtol=1e-3)

    print("KERNEL_OK")
</pallas_src>

<mosaic_0001>
module attributes {stable_mosaic.version = 11 : i64} {
  func.func @value_head_kernel(%arg0: i32, %arg1: memref<16x32xbf16, #tpu.memory_space<vmem>>, %arg2: memref<32x32xbf16, #tpu.memory_space<vmem>>, %arg3: memref<1x32xf32, #tpu.memory_space<vmem>>, %arg4: memref<32x32xbf16, #tpu.memory_space<vmem>>, %arg5: memref<1x32xf32, #tpu.memory_space<vmem>>, %arg6: memref<32x128xbf16, #tpu.memory_space<vmem>>, %arg7: memref<1x128xf32, #tpu.memory_space<vmem>>, %arg8: memref<16x128xf32, #tpu.memory_space<vmem>>) attributes {dimension_semantics = [#tpu.dimension_semantics<parallel>], iteration_bounds = array<i64: 1>, scalar_prefetch = 0 : i64, scratch_operands = 0 : i64, tpu.core_type = #tpu.core_type<tc>, window_params = [{transform_indices = @transform_0, window_bounds = array<i64: 16, 32>}, {pipeline_mode = #tpu.pipeline_mode<synchronous>, transform_indices = @transform_1, window_bounds = array<i64: 32, 32>}, {pipeline_mode = #tpu.pipeline_mode<synchronous>, transform_indices = @transform_2, window_bounds = array<i64: 1, 32>}, {pipeline_mode = #tpu.pipeline_mode<synchronous>, transform_indices = @transform_3, window_bounds = array<i64: 32, 32>}, {pipeline_mode = #tpu.pipeline_mode<synchronous>, transform_indices = @transform_4, window_bounds = array<i64: 1, 32>}, {pipeline_mode = #tpu.pipeline_mode<synchronous>, transform_indices = @transform_5, window_bounds = array<i64: 32, 128>}, {pipeline_mode = #tpu.pipeline_mode<synchronous>, transform_indices = @transform_6, window_bounds = array<i64: 1, 128>}, {transform_indices = @transform_7, window_bounds = array<i64: 16, 128>}]} {
    %c0 = arith.constant 0 : index
    %c0_0 = arith.constant 0 : index
    %0 = vector.load %arg1[%c0, %c0_0] : memref<16x32xbf16, #tpu.memory_space<vmem>>, vector<16x32xbf16>
    %c0_1 = arith.constant 0 : index
    %c0_2 = arith.constant 0 : index
    %1 = vector.load %arg2[%c0_1, %c0_2] : memref<32x32xbf16, #tpu.memory_space<vmem>>, vector<32x32xbf16>
    %cst = arith.constant dense<0.000000e+00> : vector<16x32xf32>
    %2 = tpu.matmul %0, %1, %cst {dimension_numbers = #tpu.dot_dimension_numbers<[1], [0], [0], [1], [0, 0, 1, 1], [], []>} : vector<16x32xbf16>, vector<32x32xbf16>, vector<16x32xf32> -> vector<16x32xf32>
    %c0_3 = arith.constant 0 : index
    %c0_4 = arith.constant 0 : index
    %3 = vector.load %arg3[%c0_3, %c0_4] : memref<1x32xf32, #tpu.memory_space<vmem>>, vector<1x32xf32>
    %4 = vector.broadcast %3 : vector<1x32xf32> to vector<16x32xf32>
    %5 = arith.addf %2, %4 : vector<16x32xf32>
    %cst_5 = arith.constant 0.000000e+00 : f32
    %6 = vector.broadcast %cst_5 : f32 to vector<16x32xf32>
    %7 = arith.maximumf %5, %6 : vector<16x32xf32>
    %8 = arith.truncf %7 : vector<16x32xf32> to vector<16x32xbf16>
    %c0_6 = arith.constant 0 : index
    %c0_7 = arith.constant 0 : index
    %9 = vector.load %arg4[%c0_6, %c0_7] : memref<32x32xbf16, #tpu.memory_space<vmem>>, vector<32x32xbf16>
    %cst_8 = arith.constant dense<0.000000e+00> : vector<16x32xf32>
    %10 = tpu.matmul %8, %9, %cst_8 {dimension_numbers = #tpu.dot_dimension_numbers<[1], [0], [0], [1], [0, 0, 1, 1], [], []>} : vector<16x32xbf16>, vector<32x32xbf16>, vector<16x32xf32> -> vector<16x32xf32>
    %c0_9 = arith.constant 0 : index
    %c0_10 = arith.constant 0 : index
    %11 = vector.load %arg5[%c0_9, %c0_10] : memref<1x32xf32, #tpu.memory_space<vmem>>, vector<1x32xf32>
    %12 = vector.broadcast %11 : vector<1x32xf32> to vector<16x32xf32>
    %13 = arith.addf %10, %12 : vector<16x32xf32>
    %cst_11 = arith.constant 0.000000e+00 : f32
    %14 = vector.broadcast %cst_11 : f32 to vector<16x32xf32>
    %15 = arith.maximumf %13, %14 : vector<16x32xf32>
    %16 = arith.truncf %15 : vector<16x32xf32> to vector<16x32xbf16>
    %c0_12 = arith.constant 0 : index
    %c0_13 = arith.constant 0 : index
    %17 = vector.load %arg6[%c0_12, %c0_13] : memref<32x128xbf16, #tpu.memory_space<vmem>>, vector<32x128xbf16>
    %cst_14 = arith.constant dense<0.000000e+00> : vector<16x128xf32>
    %18 = tpu.matmul %16, %17, %cst_14 {dimension_numbers = #tpu.dot_dimension_numbers<[1], [0], [0], [1], [0, 0, 1, 1], [], []>} : vector<16x32xbf16>, vector<32x128xbf16>, vector<16x128xf32> -> vector<16x128xf32>
    %c0_15 = arith.constant 0 : index
    %c0_16 = arith.constant 0 : index
    %19 = vector.load %arg7[%c0_15, %c0_16] : memref<1x128xf32, #tpu.memory_space<vmem>>, vector<1x128xf32>
    %20 = vector.broadcast %19 : vector<1x128xf32> to vector<16x128xf32>
    %21 = arith.addf %18, %20 : vector<16x128xf32>
    %c0_17 = arith.constant 0 : index
    %c0_18 = arith.constant 0 : index
    %22 = vector.load %arg8[%c0_17, %c0_18] : memref<16x128xf32, #tpu.memory_space<vmem>>, vector<16x128xf32>
    tpu.vector_store %arg8[%c0_17, %c0_18], %21 {strides = array<i32>} : memref<16x128xf32, #tpu.memory_space<vmem>>, vector<16x128xf32>,
    return
  }
  func.func @transform_0(%arg0: i32) -> (i32, i32) {
    %c0_i32 = arith.constant 0 : i32
    %c0_i32_0 = arith.constant 0 : i32
    return %arg0, %c0_i32 : i32, i32
  }
  func.func @transform_1(%arg0: i32) -> (i32, i32) {
    %c0_i32 = arith.constant 0 : i32
    %c0_i32_0 = arith.constant 0 : i32
    %c0_i32_1 = arith.constant 0 : i32
    return %c0_i32, %c0_i32_0 : i32, i32
  }
  func.func @transform_2(%arg0: i32) -> (i32, i32) {
    %c0_i32 = arith.constant 0 : i32
    %c0_i32_0 = arith.constant 0 : i32
    %c0_i32_1 = arith.constant 0 : i32
    return %c0_i32, %c0_i32_0 : i32, i32
  }
  func.func @transform_3(%arg0: i32) -> (i32, i32) {
    %c0_i32 = arith.constant 0 : i32
    %c0_i32_0 = arith.constant 0 : i32
    %c0_i32_1 = arith.constant 0 : i32
    return %c0_i32, %c0_i32_0 : i32, i32
  }
  func.func @transform_4(%arg0: i32) -> (i32, i32) {
    %c0_i32 = arith.constant 0 : i32
    %c0_i32_0 = arith.constant 0 : i32
    %c0_i32_1 = arith.constant 0 : i32
    return %c0_i32, %c0_i32_0 : i32, i32
  }
  func.func @transform_5(%arg0: i32) -> (i32, i32) {
    %c0_i32 = arith.constant 0 : i32
    %c0_i32_0 = arith.constant 0 : i32
    %c0_i32_1 = arith.constant 0 : i32
    return %c0_i32, %c0_i32_0 : i32, i32
  }
  func.func @transform_6(%arg0: i32) -> (i32, i32) {
    %c0_i32 = arith.constant 0 : i32
    %c0_i32_0 = arith.constant 0 : i32
    %c0_i32_1 = arith.constant 0 : i32
    return %c0_i32, %c0_i32_0 : i32, i32
  }
  func.func @transform_7(%arg0: i32) -> (i32, i32) {
    %c0_i32 = arith.constant 0 : i32
    %c0_i32_0 = arith.constant 0 : i32
    return %arg0, %c0_i32 : i32, i32
  }
}

module attributes {stable_mosaic.version = 11 : i64} {
  func.func @lm_head_kernel(%arg0: i32, %arg1: i32, %arg2: memref<16x32xbf16, #tpu.memory_space<vmem>>, %arg3: memref<32x256xbf16, #tpu.memory_space<vmem>>, %arg4: memref<16x256xf32, #tpu.memory_space<vmem>>) attributes {dimension_semantics = [#tpu.dimension_semantics<parallel>, #tpu.dimension_semantics<parallel>], iteration_bounds = array<i64: 1, 1>, scalar_prefetch = 0 : i64, scratch_operands = 0 : i64, tpu.core_type = #tpu.core_type<tc>, window_params = [{transform_indices = @transform_0, window_bounds = array<i64: 16, 32>}, {transform_indices = @transform_1, window_bounds = array<i64: 32, 256>}, {transform_indices = @transform_2, window_bounds = array<i64: 16, 256>}]} {
    %c0 = arith.constant 0 : index
    %c0_0 = arith.constant 0 : index
    %0 = vector.load %arg2[%c0, %c0_0] : memref<16x32xbf16, #tpu.memory_space<vmem>>, vector<16x32xbf16>
    %c0_1 = arith.constant 0 : index
    %c0_2 = arith.constant 0 : index
    %1 = vector.load %arg3[%c0_1, %c0_2] : memref<32x256xbf16, #tpu.memory_space<vmem>>, vector<32x256xbf16>
    %cst = arith.constant dense<0.000000e+00> : vector<16x256xf32>
    %2 = tpu.matmul %0, %1, %cst {dimension_numbers = #tpu.dot_dimension_numbers<[1], [0], [0], [1], [0, 0, 1, 1], [], []>} : vector<16x32xbf16>, vector<32x256xbf16>, vector<16x256xf32> -> vector<16x256xf32>
    %c0_3 = arith.constant 0 : index
    %c0_4 = arith.constant 0 : index
    %3 = vector.load %arg4[%c0_3, %c0_4] : memref<16x256xf32, #tpu.memory_space<vmem>>, vector<16x256xf32>
    tpu.vector_store %arg4[%c0_3, %c0_4], %2 {strides = array<i32>} : memref<16x256xf32, #tpu.memory_space<vmem>>, vector<16x256xf32>,
    return
  }
  func.func @transform_0(%arg0: i32, %arg1: i32) -> (i32, i32) {
    %c0_i32 = arith.constant 0 : i32
    %c0_i32_0 = arith.constant 0 : i32
    return %arg0, %c0_i32 : i32, i32
  }
  func.func @transform_1(%arg0: i32, %arg1: i32) -> (i32, i32) {
    %c0_i32 = arith.constant 0 : i32
    %c0_i32_0 = arith.constant 0 : i32
    return %c0_i32, %arg1 : i32, i32
  }
  func.func @transform_2(%arg0: i32, %arg1: i32) -> (i32, i32) {
    %c0_i32 = arith.constant 0 : i32
    return %arg0, %arg1 : i32, i32
  }
}

</mosaic_0001>

<llo_original>
// kernel: squeeze.1
$region0: #{squeeze.1}
  %s0 = inlined_call_operand.vmem [shape: f32[16], index: 0, kind: input, shape index: {}]
  %s1 = inlined_call_operand.hbm [shape: f32[2,8], index: 1, kind: output, shape index: {}]
  $region1: #{squeeze.1} parent=0
    #allocation0 [shape = 'u8[1024]{0}', space=vmem, size = 0x400, scoped, tag = 'operand span for operand 1']
    #allocation1 [shape = 's32[1]{0}', space=sflag, size = 0x4, scoped, tag = 'scoped memory for squeeze.1']
    #allocation2 [shape = 'u8[4096]{0}', space=vmem, size = 0x1000, scoped, tag = 'scoped mem for output reshape']
    #allocation3 [shape = 'u8[4096]{0}', space=vmem, size = 0x1000, scoped, tag = 'scoped mem for input reshape']
    %2 = vsyncpa [#allocation1], 0
    %s4 = sshllo.u32 0, 1
    %v5 = vld [vmem:[%s0] sm:%s4]
    %6 = vst [vmem:[#allocation3] sm:%s4] %v5
    %v7 = vld [vmem:[#allocation3] sm:$0x1]
    %vm8 = vcmask 64512
    %9 = vst.msk [vmem:[#allocation2] sm:$0x1] %vm8, %v7
    %v10 = vld [vmem:[#allocation3] sm:$0x1]
    %11 = vrot.lane.b32.xlu0 %v10, 120
    %v12 = vpop.permute.xlu0 %11
    %vm13 = vcmask 64512
    %s14 = scalar_lea.vmem [#allocation2], 1
    %15 = vst.msk [vmem:[%s14] sm:$0x1] %vm13, %v12
    %s17 = sshllo.u32 0, 2
    %v19 = vld [vmem:[#allocation2] sm:%s17]
    %s20 = sshllo.u32 0, 2
    %21 = vst [vmem:[#allocation0] sm:%s20] %v19
    %s23 = ssub.s32 32, 32
    %24 = vsyncadd [#allocation1], %s23
    %s26 = sshll.u32 [#allocation0], 4
    %s27 = int_to_ptr.vmem [resolvable:$true] %s26
    %29 = dma.vmem_to_hbm [thread:$0]  %s27, 32, %s1, [#allocation1]
    %30 = dma.done [#allocation1], 32
    %31 = vsyncpa [#allocation1], 1

// kernel: forward_with_value_head.2
$region0: #{forward_with_value_head.2}
  #allocation0 [shape = 'u32[]', space=smem, size = 0x4, offset = 0x4, fixed_abs, tag = 'smem constant byte address 0x4 - core index']
  #allocation1 [shape = 'u32[144,128]{1,0:T(1,128)}', space=vmem, size = 0x12000, scoped, tag = 'internal scratch']
  %s0 = inlined_call_operand.vmem [shape: bf16[16,32], index: 0, kind: input, shape index: {}]
  %s1 = inlined_call_operand.vmem [shape: bf16[32,256], index: 1, kind: input, shape index: {}]
  %s2 = inlined_call_operand.hbm [shape: f32[16,256], index: 2, kind: output, shape index: {}]
  %s3 = sld [smem:[#allocation0]]
  $region18: #{forward_with_value_head.2} parent=0
    _
  %s5 = ssub.s32 1, %s3
  %s6 = scalar_select 0, %s5, %s3
  $region1: #{forward_with_value_head.2} parent=0
    #allocation2 [shape = 'u8[16384]{0}', space=vmem, size = 0x4000, scoped, tag = 'output window, operand 0, single buffered']
    #allocation3 [shape = 's32[1]{0}', space=sflag, size = 0x4, scoped, tag = 'scoped memory for forward_with_value_head.2']
    %7 = vsyncpa [#allocation3], 0
    // Predicated region
    $region2: #{forward_with_value_head.2} parent=1 // pred_check
      _
    $region3: #{forward_with_value_head.2} parent=1 // pred_check_branch
      %9 = sbr.rel (0) target = $region5
    $region4: #{forward_with_value_head.2} parent=1 // pred_region
      _
    $region5: #{forward_with_value_head.2} parent=1 // pred_fallthru
      _
    // Predicated region
    $region6: #{forward_with_value_head.2} parent=1 // pred_check
      _
    $region7: #{forward_with_value_head.2} parent=1 // pred_check_branch
      %11 = sbr.rel (0) target = $region9
    $region8: #{forward_with_value_head.2} parent=1 // pred_region
      _
    $region9: #{forward_with_value_head.2} parent=1 // pred_fallthru
      _
    %v13 = vld [vmem:[%s0] sm:$0xf]
    %v14 = vld [vmem:[%s0 + $0x4] sm:$0xf]
    %v15 = vld [vmem:[%s1] sm:$0xff]
    %v16 = vld [vmem:[%s1 + $0x8] sm:$0xff]
    %v17 = vld [vmem:[%s1 + $0x10] sm:$0xff]
    %v18 = vld [vmem:[%s1 + $0x18] sm:$0xff]
    %v21 = vunpack.c.l.b16 %v13
    %v22 = vunpack.c.l.b16 %v14
    %v23 = vpack.c.b16 %v22, %v21
    %v28 = vunpack.c.l.b16 %v15
    %v29 = vunpack.c.h.b16 %v15
    %v30 = vunpack.c.l.b16 %v16
    %v31 = vunpack.c.h.b16 %v16
    %v32 = vunpack.c.l.b16 %v17
    %v33 = vunpack.c.h.b16 %v17
    %v34 = vunpack.c.l.b16 %v18
    %v35 = vunpack.c.h.b16 %v18
    %v36 = vpack.c.b16 %v30, %v28
    %v37 = vpack.c.b16 %v31, %v29
    %v38 = vpack.c.b16 %v34, %v32
    %v39 = vpack.c.b16 %v35, %v33
    %vm44 = vcmask 261120
    %v46 = vsel %vm44, %v23, 0
    %48 = vmatprep.subr.bf16.mxu0 %v37
    %49 = vmatpush1.bf16.msra.mxu0 %v36
    %50 = vmatprep.subr.bf16.mxu0 %v39
    %51 = vmatpush1.bf16.msra.mxu0 %v38
    %52 = vmatprep.subr.bf16.mxu0 0
    %53 = vmatpush1.bf16.msra.mxu0 0
    %54 = vmatprep.subr.bf16.mxu0 0
    %55 = vmatpush1.bf16.msra.mxu0 0
    %56 = vmatprep.subr.bf16.mxu0 0
    %57 = vmatpush1.bf16.msra.mxu0 0
    %58 = vmatprep.subr.bf16.mxu0 0
    %59 = vmatpush1.bf16.msra.mxu0 0
    %60 = vmatprep.subr.bf16.mxu0 0
    %61 = vmatpush1.bf16.msra.mxu0 0
    %62 = vmatprep.subr.bf16.mxu0 0
    %63 = vmatpush1.bf16.msra.mxu0 0
    %64 = vmatprep.subr.bf16.mxu0 0
    %65 = vmatpush1.bf16.msra.mxu0 0
    %66 = vmatprep.subr.bf16.mxu0 0
    %67 = vmatpush1.bf16.msra.mxu0 0
    %68 = vmatprep.subr.bf16.mxu0 0
    %69 = vmatpush1.bf16.msra.mxu0 0
    %70 = vmatprep.subr.bf16.mxu0 0
    %71 = vmatpush1.bf16.msra.mxu0 0
    %72 = vmatprep.subr.bf16.mxu0 0
    %73 = vmatpush1.bf16.msra.mxu0 0
    %74 = vmatprep.subr.bf16.mxu0 0
    %75 = vmatpush1.bf16.msra.mxu0 0
    %76 = vmatprep.subr.bf16.mxu0 0
    %77 = vmatpush1.bf16.msra.mxu0 0
    %78 = vmatprep.subr.bf16.mxu0 0
    %79 = vmatpush1.bf16.msra.mxu0 0
    %80 = vmatprep.mubr.bf16.mxu0 0
    %81 = vmatmul.mubr.bf16.gmra.mrb[0].mxu0 %v46
    %v82 = vpop.f32.mrb[0].mxu0
    %v83 = vadd.f32 0.0, %v82
    %v84 = vpop.f32.mrb[0].mxu0
    %v85 = vadd.f32 0.0, %v84
    %v86 = vpop.f32.mrb[0].mxu0
    %v87 = vadd.f32 0.0, %v86
    %v88 = vpop.f32.mrb[0].mxu0
    %v89 = vadd.f32 0.0, %v88
    %90 = vdwg.mxu0
    %91 = vst [vmem:[#allocation2] sm:$0xff] %v83
    %92 = vst [vmem:[#allocation2 + $0x8] sm:$0xff] %v85
    %93 = vst [vmem:[#allocation2 + $0x10] sm:$0xff] %v87
    %94 = vst [vmem:[#allocation2 + $0x18] sm:$0xff] %v89
    // Predicated region
    $region10: #{forward_with_value_head.2} parent=1 // pred_check
      _
    $region11: #{forward_with_value_head.2} parent=1 // pred_check_branch
      %96 = sbr.rel (0) target = $region13
    $region12: #{forward_with_value_head.2} parent=1 // pred_region
      %s98 = ssub.s32 512, 512
      %99 = vsyncadd [#allocation3], %s98
      %s100 = sshll.u32 [#allocation2], 4
      %s101 = int_to_ptr.vmem [resolvable:$true] %s100
      %106 = dma.vmem_to_hbm [thread:$0]  %s101, 512, %s2, [#allocation3], 256, 256, 16
    $region13: #{forward_with_value_head.2} parent=1 // pred_fallthru
      _
    // Predicated region
    $region14: #{forward_with_value_head.2} parent=1 // pred_check
      _
    $region15: #{forward_with_value_head.2} parent=1 // pred_check_branch
      %108 = sbr.rel (0) target = $region17
    $region16: #{forward_with_value_head.2} parent=1 // pred_region
      %109 = dma.done [#allocation3], 512
    $region17: #{forward_with_value_head.2} parent=1 // pred_fallthru
      _
    %110 = vsyncpa [#allocation3], 1

// kernel: forward_with_value_head.3
$region0: #{forward_with_value_head.3}
  #allocation0 [shape = 'u32[]', space=smem, size = 0x4, offset = 0x4, fixed_abs, tag = 'smem constant byte address 0x4 - core index']
  #allocation1 [shape = 'u32[144,128]{1,0:T(1,128)}', space=vmem, size = 0x12000, scoped, tag = 'internal scratch']
  %s0 = inlined_call_operand.vmem [shape: bf16[16,32], index: 0, kind: input, shape index: {}]
  %s1 = inlined_call_operand.vmem [shape: bf16[32,32], index: 1, kind: input, shape index: {}]
  %s2 = inlined_call_operand.vmem [shape: f32[1,32], index: 2, kind: input, shape index: {}]
  %s3 = inlined_call_operand.vmem [shape: bf16[32,32], index: 3, kind: input, shape index: {}]
  %s4 = inlined_call_operand.vmem [shape: f32[1,32], index: 4, kind: input, shape index: {}]
  %s5 = inlined_call_operand.vmem [shape: bf16[32,128], index: 5, kind: input, shape index: {}]
  %s6 = inlined_call_operand.vmem [shape: f32[1,128], index: 6, kind: input, shape index: {}]
  %s7 = inlined_call_operand.vmem [shape: f32[16,128], index: 7, kind: output, shape index: {}]
  %s8 = sld [smem:[#allocation0]]
  $region38: #{forward_with_value_head.3} parent=0
    _
  %s10 = ssub.s32 1, %s8
  %s11 = scalar_select 0, %s10, %s8
  // Predicated region
  $region2: #{forward_with_value_head.3} parent=0 // pred_check
    _
  $region3: #{forward_with_value_head.3} parent=0 // pred_check_branch
    %13 = sbr.rel (0) target = $region5
  $region4: #{forward_with_value_head.3} parent=0 // pred_region
    _
  $region5: #{forward_with_value_head.3} parent=0 // pred_fallthru
    _
  // Predicated region
  $region6: #{forward_with_value_head.3} parent=0 // pred_check
    _
  $region7: #{forward_with_value_head.3} parent=0 // pred_check_branch
    %15 = sbr.rel (0) target = $region9
  $region8: #{forward_with_value_head.3} parent=0 // pred_region
    _
  $region9: #{forward_with_value_head.3} parent=0 // pred_fallthru
    _
  // Predicated region
  $region10: #{forward_with_value_head.3} parent=0 // pred_check
    _
  $region11: #{forward_with_value_head.3} parent=0 // pred_check_branch
    %17 = sbr.rel (0) target = $region13
  $region12: #{forward_with_value_head.3} parent=0 // pred_region
    _
  $region13: #{forward_with_value_head.3} parent=0 // pred_fallthru
    _
  // Predicated region
  $region14: #{forward_with_value_head.3} parent=0 // pred_check
    _
  $region15: #{forward_with_value_head.3} parent=0 // pred_check_branch
    %19 = sbr.rel (0) target = $region17
  $region16: #{forward_with_value_head.3} parent=0 // pred_region
    _
  $region17: #{forward_with_value_head.3} parent=0 // pred_fallthru
    _
  // Predicated region
  $region18: #{forward_with_value_head.3} parent=0 // pred_check
    _
  $region19: #{forward_with_value_head.3} parent=0 // pred_check_branch
    %21 = sbr.rel (0) target = $region21
  $region20: #{forward_with_value_head.3} parent=0 // pred_region
    _
  $region21: #{forward_with_value_head.3} parent=0 // pred_fallthru
    _
  // Predicated region
  $region22: #{forward_with_value_head.3} parent=0 // pred_check
    _
  $region23: #{forward_with_value_head.3} parent=0 // pred_check_branch
    %23 = sbr.rel (0) target = $region25
  $region24: #{forward_with_value_head.3} parent=0 // pred_region
    _
  $region25: #{forward_with_value_head.3} parent=0 // pred_fallthru
    _
  // Predicated region
  $region26: #{forward_with_value_head.3} parent=0 // pred_check
    _
  $region27: #{forward_with_value_head.3} parent=0 // pred_check_branch
    %25 = sbr.rel (0) target = $region29
  $region28: #{forward_with_value_head.3} parent=0 // pred_region
    _
  $region29: #{forward_with_value_head.3} parent=0 // pred_fallthru
    _
  %v27 = vld [vmem:[%s0] sm:$0xf]
  %v28 = vld [vmem:[%s0 + $0x4] sm:$0xf]
  %v29 = vld [vmem:[%s1] sm:$0xf]
  %v30 = vld [vmem:[%s1 + $0x4] sm:$0xf]
  %v31 = vld [vmem:[%s1 + $0x8] sm:$0xf]
  %v32 = vld [vmem:[%s1 + $0xc] sm:$0xf]
  %v33 = vld [vmem:[%s2] sm:$0x1]
  %v35 = vlaneseq
  %v36 = vshrl.u32 %v35, 7
  %v37 = vsub.s32 0, %v36
  %v38 = vrot.slane %v33, %v37
  %v42 = vunpack.c.l.b16 %v27
  %v43 = vunpack.c.l.b16 %v28
  %v44 = vpack.c.b16 %v43, %v42
  %v49 = vunpack.c.l.b16 %v29
  %v50 = vunpack.c.l.b16 %v30
  %v51 = vunpack.c.l.b16 %v31
  %v52 = vunpack.c.l.b16 %v32
  %v53 = vpack.c.b16 %v50, %v49
  %v54 = vpack.c.b16 %v52, %v51
  %vm57 = vcmask 261120
  %v59 = vsel %vm57, %v44, 0
  %61 = vmatprep.subr.bf16.mxu0 0
  %62 = vmatpush1.bf16.msra.mxu0 %v53
  %63 = vmatprep.subr.bf16.mxu0 0
  %64 = vmatpush1.bf16.msra.mxu0 %v54
  %65 = vmatprep.subr.bf16.mxu0 0
  %66 = vmatpush1.bf16.msra.mxu0 0
  %67 = vmatprep.subr.bf16.mxu0 0
  %68 = vmatpush1.bf16.msra.mxu0 0
  %69 = vmatprep.subr.bf16.mxu0 0
  %70 = vmatpush1.bf16.msra.mxu0 0
  %71 = vmatprep.subr.bf16.mxu0 0
  %72 = vmatpush1.bf16.msra.mxu0 0
  %73 = vmatprep.subr.bf16.mxu0 0
  %74 = vmatpush1.bf16.msra.mxu0 0
  %75 = vmatprep.subr.bf16.mxu0 0
  %76 = vmatpush1.bf16.msra.mxu0 0
  %77 = vmatprep.subr.bf16.mxu0 0
  %78 = vmatpush1.bf16.msra.mxu0 0
  %79 = vmatprep.subr.bf16.mxu0 0
  %80 = vmatpush1.bf16.msra.mxu0 0
  %81 = vmatprep.subr.bf16.mxu0 0
  %82 = vmatpush1.bf16.msra.mxu0 0
  %83 = vmatprep.subr.bf16.mxu0 0
  %84 = vmatpush1.bf16.msra.mxu0 0
  %85 = vmatprep.subr.bf16.mxu0 0
  %86 = vmatpush1.bf16.msra.mxu0 0
  %87 = vmatprep.subr.bf16.mxu0 0
  %88 = vmatpush1.bf16.msra.mxu0 0
  %89 = vmatprep.subr.bf16.mxu0 0
  %90 = vmatpush1.bf16.msra.mxu0 0
  %91 = vmatprep.subr.bf16.mxu0 0
  %92 = vmatpush1.bf16.msra.mxu0 0
  %93 = vmatprep.mubr.bf16.mxu0 0
  %94 = vmatmul.mubr.bf16.gmra.mrb[0].mxu0 %v59
  %v95 = vpop.f32.mrb[0].mxu0
  %v96 = vadd.f32 %v38, %v95
  %v97 = vpop.f32.mrb[0].mxu0
  %v98 = vpop.f32.mrb[0].mxu0
  %v99 = vadd.f32 %v38, %v98
  %v100 = vpop.f32.mrb[0].mxu0
  %101 = vdwg.mxu0
  %v102 = vmax.f32 %v96, 0.0
  %v103 = vmax.f32 %v99, 0.0
  %v104 = vpack.c.bf16 %v103, %v102
  %v105 = vld [vmem:[%s3] sm:$0xf]
  %v106 = vld [vmem:[%s3 + $0x4] sm:$0xf]
  %v107 = vld [vmem:[%s3 + $0x8] sm:$0xf]
  %v108 = vld [vmem:[%s3 + $0xc] sm:$0xf]
  %v109 = vld [vmem:[%s4] sm:$0x1]
  %v111 = vlaneseq
  %v112 = vshrl.u32 %v111, 7
  %v113 = vsub.s32 0, %v112
  %v114 = vrot.slane %v109, %v113
  %v120 = vunpack.c.l.b16 %v105
  %v121 = vunpack.c.l.b16 %v106
  %v122 = vunpack.c.l.b16 %v107
  %v123 = vunpack.c.l.b16 %v108
  %v124 = vpack.c.b16 %v121, %v120
  %v125 = vpack.c.b16 %v123, %v122
  %v129 = vsel %vm57, %v104, 0
  %131 = vmatprep.subr.bf16.mxu0 0
  %132 = vmatpush1.bf16.msra.mxu0 %v124
  %133 = vmatprep.subr.bf16.mxu0 0
  %134 = vmatpush1.bf16.msra.mxu0 %v125
  %135 = vmatprep.subr.bf16.mxu0 0
  %136 = vmatpush1.bf16.msra.mxu0 0
  %137 = vmatprep.subr.bf16.mxu0 0
  %138 = vmatpush1.bf16.msra.mxu0 0
  %139 = vmatprep.subr.bf16.mxu0 0
  %140 = vmatpush1.bf16.msra.mxu0 0
  %141 = vmatprep.subr.bf16.mxu0 0
  %142 = vmatpush1.bf16.msra.mxu0 0
  %143 = vmatprep.subr.bf16.mxu0 0
  %144 = vmatpush1.bf16.msra.mxu0 0
  %145 = vmatprep.subr.bf16.mxu0 0
  %146 = vmatpush1.bf16.msra.mxu0 0
  %147 = vmatprep.subr.bf16.mxu0 0
  %148 = vmatpush1.bf16.msra.mxu0 0
  %149 = vmatprep.subr.bf16.mxu0 0
  %150 = vmatpush1.bf16.msra.mxu0 0
  %151 = vmatprep.subr.bf16.mxu0 0
  %152 = vmatpush1.bf16.msra.mxu0 0
  %153 = vmatprep.subr.bf16.mxu0 0
  %154 = vmatpush1.bf16.msra.mxu0 0
  %155 = vmatprep.subr.bf16.mxu0 0
  %156 = vmatpush1.bf16.msra.mxu0 0
  %157 = vmatprep.subr.bf16.mxu0 0
  %158 = vmatpush1.bf16.msra.mxu0 0
  %159 = vmatprep.subr.bf16.mxu0 0
  %160 = vmatpush1.bf16.msra.mxu0 0
  %161 = vmatprep.subr.bf16.mxu0 0
  %162 = vmatpush1.bf16.msra.mxu0 0
  %163 = vmatprep.mubr.bf16.mxu0 0
  %164 = vmatmul.mubr.bf16.gmra.mrb[0].mxu0 %v129
  %v165 = vpop.f32.mrb[0].mxu0
  %v166 = vadd.f32 %v114, %v165
  %v167 = vpop.f32.mrb[0].mxu0
  %v168 = vpop.f32.mrb[0].mxu0
  %v169 = vadd.f32 %v114, %v168
  %v170 = vpop.f32.mrb[0].mxu0
  %171 = vdwg.mxu0
  %v172 = vmax.f32 %v166, 0.0
  %v173 = vmax.f32 %v169, 0.0
  %v174 = vpack.c.bf16 %v173, %v172
  %v175 = vld [vmem:[%s5] sm:$0xf]
  %v176 = vld [vmem:[%s5 + $0x4] sm:$0xf]
  %v177 = vld [vmem:[%s5 + $0x8] sm:$0xf]
  %v178 = vld [vmem:[%s5 + $0xc] sm:$0xf]
  %v179 = vld [vmem:[%s6] sm:$0x1]
  %v181 = vlaneseq
  %v182 = vshrl.u32 %v181, 7
  %v183 = vsub.s32 0, %v182
  %v184 = vrot.slane %v179, %v183
  %v190 = vunpack.c.l.b16 %v175
  %v191 = vunpack.c.l.b16 %v176
  %v192 = vunpack.c.l.b16 %v177
  %v193 = vunpack.c.l.b16 %v178
  %v194 = vpack.c.b16 %v191, %v190
  %v195 = vpack.c.b16 %v193, %v192
  %v199 = vsel %vm57, %v174, 0
  %201 = vmatprep.subr.bf16.mxu0 0
  %202 = vmatpush1.bf16.msra.mxu0 %v194
  %203 = vmatprep.subr.bf16.mxu0 0
  %204 = vmatpush1.bf16.msra.mxu0 %v195
  %205 = vmatprep.subr.bf16.mxu0 0
  %206 = vmatpush1.bf16.msra.mxu0 0
  %207 = vmatprep.subr.bf16.mxu0 0
  %208 = vmatpush1.bf16.msra.mxu0 0
  %209 = vmatprep.subr.bf16.mxu0 0
  %210 = vmatpush1.bf16.msra.mxu0 0
  %211 = vmatprep.subr.bf16.mxu0 0
  %212 = vmatpush1.bf16.msra.mxu0 0
  %213 = vmatprep.subr.bf16.mxu0 0
  %214 = vmatpush1.bf16.msra.mxu0 0
  %215 = vmatprep.subr.bf16.mxu0 0
  %216 = vmatpush1.bf16.msra.mxu0 0
  %217 = vmatprep.subr.bf16.mxu0 0
  %218 = vmatpush1.bf16.msra.mxu0 0
  %219 = vmatprep.subr.bf16.mxu0 0
  %220 = vmatpush1.bf16.msra.mxu0 0
  %221 = vmatprep.subr.bf16.mxu0 0
  %222 = vmatpush1.bf16.msra.mxu0 0
  %223 = vmatprep.subr.bf16.mxu0 0
  %224 = vmatpush1.bf16.msra.mxu0 0
  %225 = vmatprep.subr.bf16.mxu0 0
  %226 = vmatpush1.bf16.msra.mxu0 0
  %227 = vmatprep.subr.bf16.mxu0 0
  %228 = vmatpush1.bf16.msra.mxu0 0
  %229 = vmatprep.subr.bf16.mxu0 0
  %230 = vmatpush1.bf16.msra.mxu0 0
  %231 = vmatprep.subr.bf16.mxu0 0
  %232 = vmatpush1.bf16.msra.mxu0 0
  %233 = vmatprep.mubr.bf16.mxu0 0
  %234 = vmatmul.mubr.bf16.gmra.mrb[0].mxu0 %v199
  %v235 = vpop.f32.mrb[0].mxu0
  %v236 = vadd.f32 %v184, %v235
  %v237 = vpop.f32.mrb[0].mxu0
  %v238 = vpop.f32.mrb[0].mxu0
  %v239 = vadd.f32 %v184, %v238
  %v240 = vpop.f32.mrb[0].mxu0
  %241 = vdwg.mxu0
  %242 = vst [vmem:[%s7] sm:$0xff] %v236
  %243 = vst [vmem:[%s7 + $0x8] sm:$0xff] %v239
  // Predicated region
  $region30: #{forward_with_value_head.3} parent=0 // pred_check
    _
  $region31: #{forward_with_value_head.3} parent=0 // pred_check_branch
    %245 = sbr.rel (0) target = $region33
  $region32: #{forward_with_value_head.3} parent=0 // pred_region
    _
  $region33: #{forward_with_value_head.3} parent=0 // pred_fallthru
    _
  // Predicated region
  $region34: #{forward_with_value_head.3} parent=0 // pred_check
    _
  $region35: #{forward_with_value_head.3} parent=0 // pred_check_branch
    %247 = sbr.rel (0) target = $region37
  $region36: #{forward_with_value_head.3} parent=0 // pred_region
    _
  $region37: #{forward_with_value_head.3} parent=0 // pred_fallthru
    _

</llo_original>
